<compile_context>
chip_gen: v6e
topology: v6e:2x2x1
jax: 0.10.0
libtpu: 0.0.40
codegen_flags: <defaults>
</compile_context>

<pallas_src>
import functools

import jax
import jax.numpy as jnp
from jax.experimental import pallas as pl
from jax.experimental.pallas import tpu as pltpu


# Conservative VMEM accounting (fits v7x's 64 MiB/TC; far below v5e/v6e 128 MiB).
_VMEM_TILE_BUDGET_BYTES = 40 * 1024 * 1024   # x/out tiles + resident params
_VMEM_LIMIT_BYTES = 56 * 1024 * 1024         # scoped limit handed to Mosaic
_MIN_PALLAS_X_BYTES = 256 * 1024             # below this, plain XLA is faster


def _round_up(x, m):
    return ((x + m - 1) // m) * m


def _sublane_multiple(dtype):
    # f32 -> 8 rows/vreg, bf16 -> 16, int8/fp8 -> 32 (sub-32-bit packs on sublanes).
    return max(8, 32 // jnp.dtype(dtype).itemsize)


def _diag_gaussian_head_kernel(x_ref, w_ref, b_ref, out_ref):
    # x_ref:   (TM, K)     VMEM (double-buffered over the row grid)
    # w_ref:   (K, 2*D)    VMEM (single-buffered, resident across grid steps)
    # b_ref:   (1, 2*D)    VMEM (single-buffered, resident across grid steps)
    # out_ref: (TM, 2*D)   VMEM -> interleaved [mean_0, logstd_0, mean_1, ...]
    acc = jnp.dot(x_ref[...], w_ref[...], preferred_element_type=jnp.float32)
    out_ref[...] = (acc + b_ref[...].astype(jnp.float32)).astype(out_ref.dtype)


def pack_diag_gaussian_head_params(weight, bias, log_std):
    """One-time parameter packing (do this at param-load time, not per step).

    weight:  (D, input_dim)   torch nn.Linear layout
    bias:    (D,)
    log_std: (D,)
    returns: w_packed (input_dim, 2*D), b_packed (1, 2*D)
    """
    D, K = weight.shape
    w_packed = jnp.zeros((K, 2 * D), dtype=weight.dtype)
    w_packed = w_packed.at[:, 0::2].set(weight.T)
    b_packed = jnp.zeros((1, 2 * D), dtype=bias.dtype)
    b_packed = b_packed.at[0, 0::2].set(bias)
    b_packed = b_packed.at[0, 1::2].set(log_std.astype(bias.dtype))
    return w_packed, b_packed


def _pick_row_tile(M, K, two_d, in_dtype, out_dtype, *,
                   vmem_budget_bytes, single_buffer_params):
    """Largest legal row tile that fits the VMEM budget; >=2 grid steps if possible."""
    if M <= 8:
        return max(M, 1)                      # full-extent block is always legal

    in_item = jnp.dtype(in_dtype).itemsize
    out_item = jnp.dtype(out_dtype).itemsize
    k_lanes = _round_up(K, 128)               # lane padding of the contraction dim
    d_lanes = _round_up(two_d, 128)           # lane padding of the packed output dim

    # Resident parameter footprint (one copy when pl.Buffered(1) is honored).
    param_copies = 1 if single_buffer_params else 2
    w_bytes = _round_up(K, _sublane_multiple(in_dtype)) * d_lanes * in_item
    b_bytes = _sublane_multiple(out_dtype) * d_lanes * out_item
    resident = param_copies * (w_bytes + b_bytes)

    # Double-buffered x and out tiles, per padded row.
    per_row = 2 * k_lanes * in_item + 2 * d_lanes * out_item
    avail = max(vmem_budget_bytes - resident, 8 * per_row)
    tm_cap = max(8, (avail // per_row) // 8 * 8)

    m_pad = _round_up(M, 8)
    tm = min(tm_cap, m_pad)

    # v7x has 2 TensorCores/chip: never leave the grid at a single step when
    # there are enough rows to split.  No effect on v5e/v6e beyond one extra
    # (cheap) grid step.
    if tm >= m_pad and M >= 16:
        tm = max(8, _round_up(m_pad // 2, 8))
    return tm


def diag_gaussian_action_head_forward(x, w_packed, b_packed, *,
                                      force_pallas=False,
                                      single_buffer_params=True,
                                      vmem_budget_bytes=_VMEM_TILE_BUDGET_BYTES):
    """Forward pass of DiagGaussianActionHead with pre-packed params.

    x:        (..., input_dim)
    w_packed: (input_dim, 2*D)
    b_packed: (1, 2*D)
    returns:  (..., D, 2)  == stack([means, broadcast(log_std)], dim=-1)
    """
    *lead, input_dim = x.shape
    two_d = w_packed.shape[1]
    D = two_d // 2
    M = 1
    for s in lead:
        M *= s

    x2d = x.reshape(M, input_dim)
    in_item = jnp.dtype(x.dtype).itemsize

    # Tiny problems: pallas_call launch + pipeline overhead exceeds the whole
    # op's HBM time -> let XLA fuse the head directly.
    if not force_pallas and M * input_dim * in_item < _MIN_PALLAS_X_BYTES:
        out2d = (
            jnp.dot(x2d, w_packed, preferred_element_type=jnp.float32)
            + b_packed.astype(jnp.float32)
        ).astype(x.dtype)
        return out2d.reshape(*lead, D, 2)

    TM = _pick_row_tile(M, input_dim, two_d, x.dtype, x.dtype,
                        vmem_budget_bytes=vmem_budget_bytes,
                        single_buffer_params=single_buffer_params)
    grid = (pl.cdiv(M, TM),)

    # Constant index maps -> params stay VMEM-resident; Buffered(1) drops the
    # dead second buffer (biggest win for large K*2D under v7x/v5e VMEM limits).
    param_mode = dict(pipeline_mode=pl.Buffered(1)) if single_buffer_params else {}
    in_specs = [
        pl.BlockSpec((TM, input_dim), lambda i: (i, 0)),
        pl.BlockSpec((input_dim, two_d), lambda i: (0, 0), **param_mode),
        pl.BlockSpec((1, two_d), lambda i: (0, 0), **param_mode),
    ]
    # TODO(synk): v5e-only — if the single vst slot binds for narrow 2*D, present
    # a lane-dense (M//8, 8*2D) output view instead of masked 16-lane stores.
    out_spec = pl.BlockSpec((TM, two_d), lambda i: (i, 0))

    cost = pl.CostEstimate(
        flops=2 * M * input_dim * two_d,
        transcendentals=0,
        bytes_accessed=(M * input_dim + input_dim * two_d) * in_item
        + (two_d + M * two_d) * in_item,
    )

    out2d = pl.pallas_call(
        _diag_gaussian_head_kernel,
        out_shape=jax.ShapeDtypeStruct((M, two_d), x.dtype),
        grid_spec=pltpu.PrefetchScalarGridSpec(
            num_scalar_prefetch=0,
            grid=grid,
            in_specs=in_specs,
            out_specs=out_spec,
        ),
        compiler_params=pltpu.CompilerParams(
            dimension_semantics=("parallel",),
            vmem_limit_bytes=_VMEM_LIMIT_BYTES,
        ),
        cost_estimate=cost,
    )(x2d, w_packed, b_packed)

    # Row-major (M, 2*D) -> (..., D, 2) is a free view for the interleaved layout.
    return out2d.reshape(*lead, D, 2)


def diag_gaussian_action_head(x, weight, bias, log_std, **kwargs):
    """Convenience wrapper matching the torch module signature.

    NOTE: for repeated calls, hoist pack_diag_gaussian_head_params() out of the
    step function so the (tiny) packing transpose is not re-executed.
    """
    w_packed, b_packed = pack_diag_gaussian_head_params(weight, bias, log_std)
    return diag_gaussian_action_head_forward(x, w_packed, b_packed, **kwargs)


if __name__ == "__main__":
    # Small, module-consistent shapes: batch=2, seq=8, input_dim=32, num_dims=8
    B, T, input_dim, num_dimensions = 2, 8, 32, 8

    key = jax.random.PRNGKey(0)
    kx, kw, kx2 = jax.random.split(key, 3)

    x = jax.random.normal(kx, (B, T, input_dim), dtype=jnp.float32)
    # Module __init__ shapes:
    #   linear_layer.weight: (num_dimensions, input_dim)
    #   linear_layer.bias:   (num_dimensions,)
    #   log_std:             (num_dimensions,)  (zeros at init, as in torch)
    weight = 0.01 * jax.random.normal(
        kw, (num_dimensions, input_dim), dtype=jnp.float32
    )
    bias = jnp.zeros((num_dimensions,), dtype=jnp.float32)
    log_std = jnp.zeros((num_dimensions,), dtype=jnp.float32)

    # Pack params once (outside the hot path).
    w_packed, b_packed = pack_diag_gaussian_head_params(weight, bias, log_std)

    def ref_fn(xi):
        means = xi @ weight.T + bias
        return jnp.stack(
            [means, jnp.broadcast_to(log_std, means.shape)], axis=-1
        )

    # Second input with a row count that is NOT a multiple of 8 and does not
    # divide the tile -> exercises the multi-step grid + masked tail block.
    x_big = jax.random.normal(kx2, (3, 347, input_dim), dtype=jnp.float32)

    def run(single_buffer_params):
        fwd = jax.jit(functools.partial(
            diag_gaussian_action_head_forward,
            force_pallas=True,
            single_buffer_params=single_buffer_params,
        ))
        o1 = jax.block_until_ready(fwd(x, w_packed, b_packed))
        o2 = jax.block_until_ready(fwd(x_big, w_packed, b_packed))
        return o1, o2

    try:
        out_small, out_big = run(True)
    except Exception:
        # Fallback if pl.Buffered(1) is rejected by this jax/Mosaic version:
        # default double-buffered params (correct, slightly more VMEM).
        out_small, out_big = run(False)

    assert out_small.shape == (B, T, num_dimensions, 2), out_small.shape
    assert jnp.allclose(out_small, ref_fn(x), atol=1e-5, rtol=1e-5)

    assert out_big.shape == (3, 347, num_dimensions, 2), out_big.shape
    assert jnp.allclose(out_big, ref_fn(x_big), atol=1e-5, rtol=1e-5)

    # Convenience wrapper: tiny M dispatches to the plain-XLA path by design.
    out_conv = jax.block_until_ready(
        diag_gaussian_action_head(x, weight, bias, log_std)
    )
    assert jnp.allclose(out_conv, ref_fn(x), atol=1e-5, rtol=1e-5)

    print("KERNEL_OK")
</pallas_src>

<mosaic_0001>
module attributes {stable_mosaic.version = 11 : i64} {
  func.func @_diag_gaussian_head_kernel(%arg0: i32, %arg1: memref<8x32xf32, #tpu.memory_space<vmem>>, %arg2: memref<32x16xf32, #tpu.memory_space<vmem>>, %arg3: memref<1x16xf32, #tpu.memory_space<vmem>>, %arg4: memref<8x16xf32, #tpu.memory_space<vmem>>) attributes {dimension_semantics = [#tpu.dimension_semantics<parallel>], iteration_bounds = array<i64: 2>, scalar_prefetch = 0 : i64, scratch_operands = 0 : i64, tpu.core_type = #tpu.core_type<tc>, window_params = [{transform_indices = @transform_0, window_bounds = array<i64: 8, 32>}, {pipeline_mode = #tpu.pipeline_mode<synchronous>, transform_indices = @transform_1, window_bounds = array<i64: 32, 16>}, {pipeline_mode = #tpu.pipeline_mode<synchronous>, transform_indices = @transform_2, window_bounds = array<i64: 1, 16>}, {transform_indices = @transform_3, window_bounds = array<i64: 8, 16>}]} {
    %c0 = arith.constant 0 : index
    %c0_0 = arith.constant 0 : index
    %0 = vector.load %arg1[%c0, %c0_0] : memref<8x32xf32, #tpu.memory_space<vmem>>, vector<8x32xf32>
    %c0_1 = arith.constant 0 : index
    %c0_2 = arith.constant 0 : index
    %1 = vector.load %arg2[%c0_1, %c0_2] : memref<32x16xf32, #tpu.memory_space<vmem>>, vector<32x16xf32>
    %cst = arith.constant dense<0.000000e+00> : vector<8x16xf32>
    %2 = tpu.matmul %0, %1, %cst {dimension_numbers = #tpu.dot_dimension_numbers<[1], [0], [0], [1], [0, 0, 1, 1], [], []>} : vector<8x32xf32>, vector<32x16xf32>, vector<8x16xf32> -> vector<8x16xf32>
    %c0_3 = arith.constant 0 : index
    %c0_4 = arith.constant 0 : index
    %3 = vector.load %arg3[%c0_3, %c0_4] : memref<1x16xf32, #tpu.memory_space<vmem>>, vector<1x16xf32>
    %4 = vector.broadcast %3 : vector<1x16xf32> to vector<8x16xf32>
    %5 = arith.addf %2, %4 : vector<8x16xf32>
    %c0_5 = arith.constant 0 : index
    %c0_6 = arith.constant 0 : index
    %6 = vector.load %arg4[%c0_5, %c0_6] : memref<8x16xf32, #tpu.memory_space<vmem>>, vector<8x16xf32>
    tpu.vector_store %arg4[%c0_5, %c0_6], %5 {strides = array<i32>} : memref<8x16xf32, #tpu.memory_space<vmem>>, vector<8x16xf32>,
    return
  }
  func.func @transform_0(%arg0: i32) -> (i32, i32) {
    %c0_i32 = arith.constant 0 : i32
    %c0_i32_0 = arith.constant 0 : i32
    return %arg0, %c0_i32 : i32, i32
  }
  func.func @transform_1(%arg0: i32) -> (i32, i32) {
    %c0_i32 = arith.constant 0 : i32
    %c0_i32_0 = arith.constant 0 : i32
    %c0_i32_1 = arith.constant 0 : i32
    return %c0_i32, %c0_i32_0 : i32, i32
  }
  func.func @transform_2(%arg0: i32) -> (i32, i32) {
    %c0_i32 = arith.constant 0 : i32
    %c0_i32_0 = arith.constant 0 : i32
    %c0_i32_1 = arith.constant 0 : i32
    return %c0_i32, %c0_i32_0 : i32, i32
  }
  func.func @transform_3(%arg0: i32) -> (i32, i32) {
    %c0_i32 = arith.constant 0 : i32
    %c0_i32_0 = arith.constant 0 : i32
    return %arg0, %c0_i32 : i32, i32
  }
}

module attributes {stable_mosaic.version = 11 : i64} {
  func.func @_diag_gaussian_head_kernel(%arg0: i32, %arg1: memref<8x32xf32, #tpu.memory_space<vmem>>, %arg2: memref<32x16xf32, #tpu.memory_space<vmem>>, %arg3: memref<1x16xf32, #tpu.memory_space<vmem>>, %arg4: memref<8x16xf32, #tpu.memory_space<vmem>>) attributes {dimension_semantics = [#tpu.dimension_semantics<parallel>], iteration_bounds = array<i64: 2>, scalar_prefetch = 0 : i64, scratch_operands = 0 : i64, tpu.core_type = #tpu.core_type<tc>, window_params = [{transform_indices = @transform_0, window_bounds = array<i64: 8, 32>}, {pipeline_mode = #tpu.pipeline_mode<synchronous>, transform_indices = @transform_1, window_bounds = array<i64: 32, 16>}, {pipeline_mode = #tpu.pipeline_mode<synchronous>, transform_indices = @transform_2, window_bounds = array<i64: 1, 16>}, {transform_indices = @transform_3, window_bounds = array<i64: 8, 16>}]} {
    %c0 = arith.constant 0 : index
    %c0_0 = arith.constant 0 : index
    %0 = vector.load %arg1[%c0, %c0_0] : memref<8x32xf32, #tpu.memory_space<vmem>>, vector<8x32xf32>
    %c0_1 = arith.constant 0 : index
    %c0_2 = arith.constant 0 : index
    %1 = vector.load %arg2[%c0_1, %c0_2] : memref<32x16xf32, #tpu.memory_space<vmem>>, vector<32x16xf32>
    %cst = arith.constant dense<0.000000e+00> : vector<8x16xf32>
    %2 = tpu.matmul %0, %1, %cst {dimension_numbers = #tpu.dot_dimension_numbers<[1], [0], [0], [1], [0, 0, 1, 1], [], []>} : vector<8x32xf32>, vector<32x16xf32>, vector<8x16xf32> -> vector<8x16xf32>
    %c0_3 = arith.constant 0 : index
    %c0_4 = arith.constant 0 : index
    %3 = vector.load %arg3[%c0_3, %c0_4] : memref<1x16xf32, #tpu.memory_space<vmem>>, vector<1x16xf32>
    %4 = vector.broadcast %3 : vector<1x16xf32> to vector<8x16xf32>
    %5 = arith.addf %2, %4 : vector<8x16xf32>
    %c0_5 = arith.constant 0 : index
    %c0_6 = arith.constant 0 : index
    %6 = vector.load %arg4[%c0_5, %c0_6] : memref<8x16xf32, #tpu.memory_space<vmem>>, vector<8x16xf32>
    tpu.vector_store %arg4[%c0_5, %c0_6], %5 {strides = array<i32>} : memref<8x16xf32, #tpu.memory_space<vmem>>, vector<8x16xf32>,
    return
  }
  func.func @transform_0(%arg0: i32) -> (i32, i32) {
    %c0_i32 = arith.constant 0 : i32
    %c0_i32_0 = arith.constant 0 : i32
    return %arg0, %c0_i32 : i32, i32
  }
  func.func @transform_1(%arg0: i32) -> (i32, i32) {
    %c0_i32 = arith.constant 0 : i32
    %c0_i32_0 = arith.constant 0 : i32
    %c0_i32_1 = arith.constant 0 : i32
    return %c0_i32, %c0_i32_0 : i32, i32
  }
  func.func @transform_2(%arg0: i32) -> (i32, i32) {
    %c0_i32 = arith.constant 0 : i32
    %c0_i32_0 = arith.constant 0 : i32
    %c0_i32_1 = arith.constant 0 : i32
    return %c0_i32, %c0_i32_0 : i32, i32
  }
  func.func @transform_3(%arg0: i32) -> (i32, i32) {
    %c0_i32 = arith.constant 0 : i32
    %c0_i32_0 = arith.constant 0 : i32
    return %arg0, %c0_i32 : i32, i32
  }
}

</mosaic_0001>

<llo_original>
// kernel: diag_gaussian_action_head_forward.1
$region0: #{diag_gaussian_action_head_forward.1}
  #allocation0 [shape = 'u32[]', space=smem, size = 0x4, offset = 0x4, fixed_abs, tag = 'smem constant byte address 0x4 - core index']
  #allocation1 [shape = 'u32[144,128]{1,0:T(1,128)}', space=vmem, size = 0x12000, scoped, tag = 'internal scratch']
  %s0 = inlined_call_operand.vmem [shape: f32[16,32], index: 0, kind: input, shape index: {}]
  %s1 = inlined_call_operand.vmem [shape: f32[32,16], index: 1, kind: input, shape index: {}]
  %s2 = inlined_call_operand.vmem [shape: f32[1,16], index: 2, kind: input, shape index: {}]
  %s3 = inlined_call_operand.vmem [shape: f32[16,16], index: 3, kind: output, shape index: {}]
  %s4 = sld [smem:[#allocation0]]
  $region45: #{diag_gaussian_action_head_forward.1} parent=0
    _
  %s6 = ssub.s32 1, %s4
  %s7 = scalar_select 0, %s6, %s4
  loop: start=0, step=1, limit=4
  $region2: #{diag_gaussian_action_head_forward.1} parent=0 // loop_pre_header
    _
  $region3: #{diag_gaussian_action_head_forward.1} parent=0 // loop_header
    %s9 = sphi 0, %s13
    %p10 = scmp.ge.s32.totalorder %s9, 4
    %s19 = sphi 0, %s21
    %s22 = sphi 0, %s19
    %s23 = sphi 0, %s22
    %s39 = sphi 0, %s23
    %s43 = sphi 0, %s43
    %s45 = sphi 0, %s43
    %s46 = sphi 0, %s45
    %s60 = sphi 0, %s46
    %s64 = sphi 0, %s64
    %s66 = sphi 0, %s64
    %s67 = sphi 0, %s66
    %s81 = sphi 0, %s67
    %s87 = sphi 0, %s89
    %s90 = sphi 0, %s87
    %s91 = sphi 0, %s90
    %s107 = sphi 0, %s91
  $region4: #{diag_gaussian_action_head_forward.1} parent=0 // loop_header_branch
    %12 = sbr.rel (%p10) target = $region8
  $region5: #{diag_gaussian_action_head_forward.1} parent=0 // loop_body
    %s14 = ssub.s32 %s9, 1
    %s15 = ssub.s32 %s9, 2
    %s16 = sadd.s32 %s9, 1
    %s17 = ssub.s32 %s9, %s16
    %p18 = scmp.eq.s32.totalorder %s17, 0
    %s20 = sadd.s32 %s19, 1
    %s21 = scalar_select %p18, %s19, %s20
    %p24 = pneg %p18
    %p25 = scmp.eq.s32.totalorder %s9, 1
    %p26 = por %p24, %p25
    %p27 = scmp.ne.s32.totalorder %s19, %s22
    %p28 = scmp.eq.s32.totalorder %s9, 0
    %p29 = por %p27, %p28
    %p30 = scmp.ne.s32.totalorder %s19, %s22
    %p31 = scmp.eq.s32.totalorder %s14, 1
    %p32 = por %p30, %p31
    %p33 = scmp.ne.s32.totalorder %s22, %s23
    %p34 = scmp.eq.s32.totalorder %s14, 0
    %p35 = por %p33, %p34
    %p36 = scmp.ne.s32.totalorder %s22, %s23
    %p37 = scmp.eq.s32.totalorder %s15, 1
    %p38 = por %p36, %p37
    %p40 = scmp.ne.s32.totalorder %s23, %s39
    %p41 = scmp.eq.s32.totalorder %s15, 0
    %p42 = por %p40, %p41
    %s44 = sadd.s32 %s43, 1
    %p47 = scmp.eq.s32.totalorder %s9, 1
    %p48 = scmp.ne.s32.totalorder %s43, %s45
    %p49 = scmp.eq.s32.totalorder %s9, 0
    %p50 = por %p48, %p49
    %p51 = scmp.ne.s32.totalorder %s43, %s45
    %p52 = scmp.eq.s32.totalorder %s14, 1
    %p53 = por %p51, %p52
    %p54 = scmp.ne.s32.totalorder %s45, %s46
    %p55 = scmp.eq.s32.totalorder %s14, 0
    %p56 = por %p54, %p55
    %p57 = scmp.ne.s32.totalorder %s45, %s46
    %p58 = scmp.eq.s32.totalorder %s15, 1
    %p59 = por %p57, %p58
    %p61 = scmp.ne.s32.totalorder %s46, %s60
    %p62 = scmp.eq.s32.totalorder %s15, 0
    %p63 = por %p61, %p62
    %s65 = sadd.s32 %s64, 1
    %p68 = scmp.eq.s32.totalorder %s9, 1
    %p69 = scmp.ne.s32.totalorder %s64, %s66
    %p70 = scmp.eq.s32.totalorder %s9, 0
    %p71 = por %p69, %p70
    %p72 = scmp.ne.s32.totalorder %s64, %s66
    %p73 = scmp.eq.s32.totalorder %s14, 1
    %p74 = por %p72, %p73
    %p75 = scmp.ne.s32.totalorder %s66, %s67
    %p76 = scmp.eq.s32.totalorder %s14, 0
    %p77 = por %p75, %p76
    %p78 = scmp.ne.s32.totalorder %s66, %s67
    %p79 = scmp.eq.s32.totalorder %s15, 1
    %p80 = por %p78, %p79
    %p82 = scmp.ne.s32.totalorder %s67, %s81
    %p83 = scmp.eq.s32.totalorder %s15, 0
    %p84 = por %p82, %p83
    %s85 = ssub.s32 %s9, %s16
    %p86 = scmp.eq.s32.totalorder %s85, 0
    %s88 = sadd.s32 %s87, 1
    %s89 = scalar_select %p86, %s87, %s88
    %p92 = pneg %p86
    %p93 = scmp.eq.s32.totalorder %s9, 1
    %p94 = por %p92, %p93
    %p95 = scmp.ne.s32.totalorder %s87, %s90
    %p96 = scmp.eq.s32.totalorder %s9, 0
    %p97 = por %p95, %p96
    %p98 = scmp.ne.s32.totalorder %s87, %s90
    %p99 = scmp.eq.s32.totalorder %s14, 1
    %p100 = por %p98, %p99
    %p101 = scmp.ne.s32.totalorder %s90, %s91
    %p102 = scmp.eq.s32.totalorder %s14, 0
    %p103 = por %p101, %p102
    %p104 = scmp.ne.s32.totalorder %s90, %s91
    %p105 = scmp.eq.s32.totalorder %s15, 1
    %p106 = por %p104, %p105
    %p108 = scmp.ne.s32.totalorder %s91, %s107
    %p109 = scmp.eq.s32.totalorder %s15, 0
    %p110 = por %p108, %p109
    %p111 = scmp.le.s32.totalorder 1, %s9
    %p112 = scmp.lt.s32.totalorder %s9, 3
    %p113 = pnand %p111, %p112
    %p114 = pneg %p113
    // Predicated region
    $region9: #{diag_gaussian_action_head_forward.1} parent=5 // pred_check
      _
    $region10: #{diag_gaussian_action_head_forward.1} parent=5 // pred_check_branch
      %116 = sbr.rel (%p113) target = $region12
    $region11: #{diag_gaussian_action_head_forward.1} parent=5 // pred_region
      %s117 = ssub.s32 %s9, 1
      // Predicated region
      $region13: #{diag_gaussian_action_head_forward.1} parent=11 // pred_check
        %p118 = pneg %p56
      $region14: #{diag_gaussian_action_head_forward.1} parent=11 // pred_check_branch
        %120 = sbr.rel (%p118) target = $region16
      $region15: #{diag_gaussian_action_head_forward.1} parent=11 // pred_region
        _
      $region16: #{diag_gaussian_action_head_forward.1} parent=11 // pred_fallthru
        _
      // Predicated region
      $region17: #{diag_gaussian_action_head_forward.1} parent=11 // pred_check
        %p121 = pneg %p77
      $region18: #{diag_gaussian_action_head_forward.1} parent=11 // pred_check_branch
        %123 = sbr.rel (%p121) target = $region20
      $region19: #{diag_gaussian_action_head_forward.1} parent=11 // pred_region
        _
      $region20: #{diag_gaussian_action_head_forward.1} parent=11 // pred_fallthru
        _
    $region12: #{diag_gaussian_action_head_forward.1} parent=5 // pred_fallthru
      _
    %p124 = scmp.lt.s32.totalorder %s9, 2
    // Predicated region
    $region21: #{diag_gaussian_action_head_forward.1} parent=5 // pred_check
      %p125 = pneg %p124
    $region22: #{diag_gaussian_action_head_forward.1} parent=5 // pred_check_branch
      %127 = sbr.rel (%p125) target = $region24
    $region23: #{diag_gaussian_action_head_forward.1} parent=5 // pred_region
      // Predicated region
      $region25: #{diag_gaussian_action_head_forward.1} parent=23 // pred_check
        %p128 = pneg %p29
      $region26: #{diag_gaussian_action_head_forward.1} parent=23 // pred_check_branch
        %130 = sbr.rel (%p128) target = $region28
      $region27: #{diag_gaussian_action_head_forward.1} parent=23 // pred_region
        %p131 = scmp.lt.s32.totalorder %s9, 1
        %s132 = scalar_select %p131, %s9, 1
        %s133 = smul.addr %s132, 8
        %s134 = scalar_lea.vmem %s0, %s133
      $region28: #{diag_gaussian_action_head_forward.1} parent=23 // pred_fallthru
        _
    $region24: #{diag_gaussian_action_head_forward.1} parent=5 // pred_fallthru
      _
    %p135 = scmp.le.s32.totalorder 1, %s9
    %p136 = scmp.lt.s32.totalorder %s9, 3
    %p137 = pnand %p135, %p136
    %p138 = pneg %p137
    // Predicated region
    $region29: #{diag_gaussian_action_head_forward.1} parent=5 // pred_check
      _
    $region30: #{diag_gaussian_action_head_forward.1} parent=5 // pred_check_branch
      %140 = sbr.rel (%p137) target = $region32
    $region31: #{diag_gaussian_action_head_forward.1} parent=5 // pred_region
      %s141 = ssub.s32 %s9, 1
      %p142 = scmp.lt.s32.totalorder %s14, 1
      %s143 = scalar_select %p142, %s14, 1
      %s144 = smul.addr %s143, 8
      %s145 = scalar_lea.vmem %s0, %s144
      %p146 = pneg %p35
      %p147 = pneg %p32
      %p148 = pneg %p56
      %p149 = pneg %p53
      %p150 = pneg %p77
      %p151 = pneg %p74
      %p152 = pneg %p103
      %p153 = pneg %p100
      %p154 = scmp.lt.s32.totalorder %s14, 1
      %s155 = scalar_select %p154, %s14, 1
      %s156 = smul.addr %s155, 8
      %s157 = scalar_lea.vmem %s3, %s156
      %p158 = scmp.lt.s32.totalorder %s14, 1
      %s159 = scalar_select %p158, %s14, 1
      %s160 = smul.addr %s159, 8
      %s161 = scalar_lea.vmem %s0, %s160
      %p162 = scmp.lt.s32.totalorder %s14, 1
      %s163 = scalar_select %p162, %s14, 1
      %s164 = smul.addr %s163, 8
      %s165 = scalar_lea.vmem %s3, %s164
      %v166 = vld [vmem:[%s161] sm:$0xff]
      %v167 = vld [vmem:[%s1] sm:$0xff]
      %v168 = vld [vmem:[%s1 + $0x8] sm:$0xff]
      %v169 = vld [vmem:[%s1 + $0x10] sm:$0xff]
      %v170 = vld [vmem:[%s1 + $0x18] sm:$0xff]
      %v171 = vld [vmem:[%s2] sm:$0x1]
      %v173 = vlaneseq
      %v174 = vshrl.u32 %v173, 7
      %v175 = vsub.s32 0, %v174
      %v176 = vrot.slane %v171, %v175
      %vm178 = vcmask 261120
      %v180 = vsel %vm178, %v166, 0
      %182 = vmatprep.subr.mxu0 0.0
      %183 = vmatpush1.msra.mxu0 0.0
      %184 = vmatprep.subr.mxu0 0.0
      %185 = vmatpush1.msra.mxu0 0.0
      %186 = vmatprep.subr.mxu0 0.0
      %187 = vmatpush1.msra.mxu0 0.0
      %188 = vmatprep.subr.mxu0 0.0
      %189 = vmatpush1.msra.mxu0 0.0
      %190 = vmatprep.subr.mxu0 0.0
      %191 = vmatpush1.msra.mxu0 0.0
      %192 = vmatprep.subr.mxu0 0.0
      %193 = vmatpush1.msra.mxu0 0.0
      %194 = vmatprep.subr.mxu0 0.0
      %195 = vmatpush1.msra.mxu0 0.0
      %196 = vmatprep.subr.mxu0 0.0
      %197 = vmatpush1.msra.mxu0 0.0
      %198 = vmatprep.subr.mxu0 0.0
      %199 = vmatpush1.msra.mxu0 0.0
      %200 = vmatprep.subr.mxu0 0.0
      %201 = vmatpush1.msra.mxu0 0.0
      %202 = vmatprep.subr.mxu0 0.0
      %203 = vmatpush1.msra.mxu0 0.0
      %204 = vmatprep.subr.mxu0 0.0
      %205 = vmatpush1.msra.mxu0 0.0
      %206 = vmatprep.subr.mxu0 0.0
      %207 = vmatpush1.msra.mxu0 %v170
      %208 = vmatprep.subr.mxu0 0.0
      %209 = vmatpush1.msra.mxu0 %v169
      %210 = vmatprep.subr.mxu0 0.0
      %211 = vmatpush1.msra.mxu0 %v168
      %212 = vmatprep.subr.mxu0 0.0
      %213 = vmatpush1.msra.mxu0 %v167
      %214 = vmatprep.subr.mxu0 0.0
      %215 = vmatpush2.msra.mxu0 0.0
      %216 = vmatprep.subr.mxu0 0.0
      %217 = vmatpush2.msra.mxu0 0.0
      %218 = vmatprep.subr.mxu0 0.0
      %219 = vmatpush2.msra.mxu0 0.0
      %220 = vmatprep.subr.mxu0 0.0
      %221 = vmatpush2.msra.mxu0 0.0
      %222 = vmatprep.subr.mxu0 0.0
      %223 = vmatpush2.msra.mxu0 0.0
      %224 = vmatprep.subr.mxu0 0.0
      %225 = vmatpush2.msra.mxu0 0.0
      %226 = vmatprep.subr.mxu0 0.0
      %227 = vmatpush2.msra.mxu0 0.0
      %228 = vmatprep.subr.mxu0 0.0
      %229 = vmatpush2.msra.mxu0 0.0
      %230 = vmatprep.subr.mxu0 0.0
      %231 = vmatpush2.msra.mxu0 0.0
      %232 = vmatprep.subr.mxu0 0.0
      %233 = vmatpush2.msra.mxu0 0.0
      %234 = vmatprep.subr.mxu0 0.0
      %235 = vmatpush2.msra.mxu0 0.0
      %236 = vmatprep.subr.mxu0 0.0
      %237 = vmatpush2.msra.mxu0 0.0
      %238 = vmatprep.subr.mxu0 0.0
      %239 = vmatpush2.msra.mxu0 0.0
      %240 = vmatprep.subr.mxu0 0.0
      %241 = vmatpush2.msra.mxu0 0.0
      %242 = vmatprep.subr.mxu0 0.0
      %243 = vmatpush2.msra.mxu0 0.0
      %244 = vmatprep.subr.mxu0 0.0
      %245 = vmatpush2.msra.mxu0 0.0
      %246 = vmatprep.mubr.f32.mxu0 0.0
      %247 = vmatmul.mubr.f32.gmra.mxu0 %v180
      %v248 = vpop.f32.mrf.mxu0
      %v249 = vadd.f32 %v176, %v248
      %v250 = vpop.f32.mrf.mxu0
      %251 = vdwg.mxu0
      %vm252 = vcmask 130048
      %253 = vst.msk [vmem:[%s165] sm:$0xff] %vm252, %v249
      %p254 = scmp.lt.s32.totalorder %s14, 1
      %s255 = scalar_select %p254, %s14, 1
      %s256 = smul.addr %s255, 8
      %s257 = scalar_lea.vmem %s3, %s256
      // Predicated region
      $region33: #{diag_gaussian_action_head_forward.1} parent=31 // pred_check
        %p258 = pneg %p100
      $region34: #{diag_gaussian_action_head_forward.1} parent=31 // pred_check_branch
        %260 = sbr.rel (%p258) target = $region36
      $region35: #{diag_gaussian_action_head_forward.1} parent=31 // pred_region
        _
      $region36: #{diag_gaussian_action_head_forward.1} parent=31 // pred_fallthru
        _
    $region32: #{diag_gaussian_action_head_forward.1} parent=5 // pred_fallthru
      _
    %p261 = scmp.le.s32.totalorder 2, %s9
    // Predicated region
    $region37: #{diag_gaussian_action_head_forward.1} parent=5 // pred_check
      %p262 = pneg %p261
    $region38: #{diag_gaussian_action_head_forward.1} parent=5 // pred_check_branch
      %264 = sbr.rel (%p262) target = $region40
    $region39: #{diag_gaussian_action_head_forward.1} parent=5 // pred_region
      %s265 = ssub.s32 %s9, 2
      // Predicated region
      $region41: #{diag_gaussian_action_head_forward.1} parent=39 // pred_check
        %p266 = pneg %p106
      $region42: #{diag_gaussian_action_head_forward.1} parent=39 // pred_check_branch
        %268 = sbr.rel (%p266) target = $region44
      $region43: #{diag_gaussian_action_head_forward.1} parent=39 // pred_region
        %p269 = scmp.lt.s32.totalorder %s15, 1
        %s270 = scalar_select %p269, %s15, 1
        %s271 = smul.addr %s270, 8
        %s272 = scalar_lea.vmem %s3, %s271
      $region44: #{diag_gaussian_action_head_forward.1} parent=39 // pred_fallthru
        _
    $region40: #{diag_gaussian_action_head_forward.1} parent=5 // pred_fallthru
      _
  $region6: #{diag_gaussian_action_head_forward.1} parent=0 // loop_footer
    %s13 = sadd.s32 1, %s9
  $region7: #{diag_gaussian_action_head_forward.1} parent=0 // loop_footer_branch
    %8 = sbr.rel target = $region3
  $region8: #{diag_gaussian_action_head_forward.1} parent=0 // loop_exit
    _

// kernel: diag_gaussian_action_head_forward.1
$region0: #{diag_gaussian_action_head_forward.1}
  #allocation0 [shape = 'u32[]', space=smem, size = 0x4, offset = 0x4, fixed_abs, tag = 'smem constant byte address 0x4 - core index']
  #allocation1 [shape = 'u32[144,128]{1,0:T(1,128)}', space=vmem, size = 0x12000, scoped, tag = 'internal scratch']
  %s0 = inlined_call_operand.vmem [shape: f32[16,32], index: 0, kind: input, shape index: {}]
  %s1 = inlined_call_operand.vmem [shape: f32[32,16], index: 1, kind: input, shape index: {}]
  %s2 = inlined_call_operand.vmem [shape: f32[1,16], index: 2, kind: input, shape index: {}]
  %s3 = inlined_call_operand.vmem [shape: f32[16,16], index: 3, kind: output, shape index: {}]
  %s4 = sld [smem:[#allocation0]]
  $region45: #{diag_gaussian_action_head_forward.1} parent=0
    _
  %s6 = ssub.s32 1, %s4
  %s7 = scalar_select 0, %s6, %s4
  loop: start=0, step=1, limit=4
  $region2: #{diag_gaussian_action_head_forward.1} parent=0 // loop_pre_header
    _
  $region3: #{diag_gaussian_action_head_forward.1} parent=0 // loop_header
    %s9 = sphi 0, %s13
    %p10 = scmp.ge.s32.totalorder %s9, 4
    %s19 = sphi 0, %s21
    %s22 = sphi 0, %s19
    %s23 = sphi 0, %s22
    %s39 = sphi 0, %s23
    %s43 = sphi 0, %s43
    %s45 = sphi 0, %s43
    %s46 = sphi 0, %s45
    %s60 = sphi 0, %s46
    %s64 = sphi 0, %s64
    %s66 = sphi 0, %s64
    %s67 = sphi 0, %s66
    %s81 = sphi 0, %s67
    %s87 = sphi 0, %s89
    %s90 = sphi 0, %s87
    %s91 = sphi 0, %s90
    %s107 = sphi 0, %s91
  $region4: #{diag_gaussian_action_head_forward.1} parent=0 // loop_header_branch
    %12 = sbr.rel (%p10) target = $region8
  $region5: #{diag_gaussian_action_head_forward.1} parent=0 // loop_body
    %s14 = ssub.s32 %s9, 1
    %s15 = ssub.s32 %s9, 2
    %s16 = sadd.s32 %s9, 1
    %s17 = ssub.s32 %s9, %s16
    %p18 = scmp.eq.s32.totalorder %s17, 0
    %s20 = sadd.s32 %s19, 1
    %s21 = scalar_select %p18, %s19, %s20
    %p24 = pneg %p18
    %p25 = scmp.eq.s32.totalorder %s9, 1
    %p26 = por %p24, %p25
    %p27 = scmp.ne.s32.totalorder %s19, %s22
    %p28 = scmp.eq.s32.totalorder %s9, 0
    %p29 = por %p27, %p28
    %p30 = scmp.ne.s32.totalorder %s19, %s22
    %p31 = scmp.eq.s32.totalorder %s14, 1
    %p32 = por %p30, %p31
    %p33 = scmp.ne.s32.totalorder %s22, %s23
    %p34 = scmp.eq.s32.totalorder %s14, 0
    %p35 = por %p33, %p34
    %p36 = scmp.ne.s32.totalorder %s22, %s23
    %p37 = scmp.eq.s32.totalorder %s15, 1
    %p38 = por %p36, %p37
    %p40 = scmp.ne.s32.totalorder %s23, %s39
    %p41 = scmp.eq.s32.totalorder %s15, 0
    %p42 = por %p40, %p41
    %s44 = sadd.s32 %s43, 1
    %p47 = scmp.eq.s32.totalorder %s9, 1
    %p48 = scmp.ne.s32.totalorder %s43, %s45
    %p49 = scmp.eq.s32.totalorder %s9, 0
    %p50 = por %p48, %p49
    %p51 = scmp.ne.s32.totalorder %s43, %s45
    %p52 = scmp.eq.s32.totalorder %s14, 1
    %p53 = por %p51, %p52
    %p54 = scmp.ne.s32.totalorder %s45, %s46
    %p55 = scmp.eq.s32.totalorder %s14, 0
    %p56 = por %p54, %p55
    %p57 = scmp.ne.s32.totalorder %s45, %s46
    %p58 = scmp.eq.s32.totalorder %s15, 1
    %p59 = por %p57, %p58
    %p61 = scmp.ne.s32.totalorder %s46, %s60
    %p62 = scmp.eq.s32.totalorder %s15, 0
    %p63 = por %p61, %p62
    %s65 = sadd.s32 %s64, 1
    %p68 = scmp.eq.s32.totalorder %s9, 1
    %p69 = scmp.ne.s32.totalorder %s64, %s66
    %p70 = scmp.eq.s32.totalorder %s9, 0
    %p71 = por %p69, %p70
    %p72 = scmp.ne.s32.totalorder %s64, %s66
    %p73 = scmp.eq.s32.totalorder %s14, 1
    %p74 = por %p72, %p73
    %p75 = scmp.ne.s32.totalorder %s66, %s67
    %p76 = scmp.eq.s32.totalorder %s14, 0
    %p77 = por %p75, %p76
    %p78 = scmp.ne.s32.totalorder %s66, %s67
    %p79 = scmp.eq.s32.totalorder %s15, 1
    %p80 = por %p78, %p79
    %p82 = scmp.ne.s32.totalorder %s67, %s81
    %p83 = scmp.eq.s32.totalorder %s15, 0
    %p84 = por %p82, %p83
    %s85 = ssub.s32 %s9, %s16
    %p86 = scmp.eq.s32.totalorder %s85, 0
    %s88 = sadd.s32 %s87, 1
    %s89 = scalar_select %p86, %s87, %s88
    %p92 = pneg %p86
    %p93 = scmp.eq.s32.totalorder %s9, 1
    %p94 = por %p92, %p93
    %p95 = scmp.ne.s32.totalorder %s87, %s90
    %p96 = scmp.eq.s32.totalorder %s9, 0
    %p97 = por %p95, %p96
    %p98 = scmp.ne.s32.totalorder %s87, %s90
    %p99 = scmp.eq.s32.totalorder %s14, 1
    %p100 = por %p98, %p99
    %p101 = scmp.ne.s32.totalorder %s90, %s91
    %p102 = scmp.eq.s32.totalorder %s14, 0
    %p103 = por %p101, %p102
    %p104 = scmp.ne.s32.totalorder %s90, %s91
    %p105 = scmp.eq.s32.totalorder %s15, 1
    %p106 = por %p104, %p105
    %p108 = scmp.ne.s32.totalorder %s91, %s107
    %p109 = scmp.eq.s32.totalorder %s15, 0
    %p110 = por %p108, %p109
    %p111 = scmp.le.s32.totalorder 1, %s9
    %p112 = scmp.lt.s32.totalorder %s9, 3
    %p113 = pnand %p111, %p112
    %p114 = pneg %p113
    // Predicated region
    $region9: #{diag_gaussian_action_head_forward.1} parent=5 // pred_check
      _
    $region10: #{diag_gaussian_action_head_forward.1} parent=5 // pred_check_branch
      %116 = sbr.rel (%p113) target = $region12
    $region11: #{diag_gaussian_action_head_forward.1} parent=5 // pred_region
      %s117 = ssub.s32 %s9, 1
      // Predicated region
      $region13: #{diag_gaussian_action_head_forward.1} parent=11 // pred_check
        %p118 = pneg %p56
      $region14: #{diag_gaussian_action_head_forward.1} parent=11 // pred_check_branch
        %120 = sbr.rel (%p118) target = $region16
      $region15: #{diag_gaussian_action_head_forward.1} parent=11 // pred_region
        _
      $region16: #{diag_gaussian_action_head_forward.1} parent=11 // pred_fallthru
        _
      // Predicated region
      $region17: #{diag_gaussian_action_head_forward.1} parent=11 // pred_check
        %p121 = pneg %p77
      $region18: #{diag_gaussian_action_head_forward.1} parent=11 // pred_check_branch
        %123 = sbr.rel (%p121) target = $region20
      $region19: #{diag_gaussian_action_head_forward.1} parent=11 // pred_region
        _
      $region20: #{diag_gaussian_action_head_forward.1} parent=11 // pred_fallthru
        _
    $region12: #{diag_gaussian_action_head_forward.1} parent=5 // pred_fallthru
      _
    %p124 = scmp.lt.s32.totalorder %s9, 2
    // Predicated region
    $region21: #{diag_gaussian_action_head_forward.1} parent=5 // pred_check
      %p125 = pneg %p124
    $region22: #{diag_gaussian_action_head_forward.1} parent=5 // pred_check_branch
      %127 = sbr.rel (%p125) target = $region24
    $region23: #{diag_gaussian_action_head_forward.1} parent=5 // pred_region
      // Predicated region
      $region25: #{diag_gaussian_action_head_forward.1} parent=23 // pred_check
        %p128 = pneg %p29
      $region26: #{diag_gaussian_action_head_forward.1} parent=23 // pred_check_branch
        %130 = sbr.rel (%p128) target = $region28
      $region27: #{diag_gaussian_action_head_forward.1} parent=23 // pred_region
        %p131 = scmp.lt.s32.totalorder %s9, 1
        %s132 = scalar_select %p131, %s9, 1
        %s133 = smul.addr %s132, 8
        %s134 = scalar_lea.vmem %s0, %s133
      $region28: #{diag_gaussian_action_head_forward.1} parent=23 // pred_fallthru
        _
    $region24: #{diag_gaussian_action_head_forward.1} parent=5 // pred_fallthru
      _
    %p135 = scmp.le.s32.totalorder 1, %s9
    %p136 = scmp.lt.s32.totalorder %s9, 3
    %p137 = pnand %p135, %p136
    %p138 = pneg %p137
    // Predicated region
    $region29: #{diag_gaussian_action_head_forward.1} parent=5 // pred_check
      _
    $region30: #{diag_gaussian_action_head_forward.1} parent=5 // pred_check_branch
      %140 = sbr.rel (%p137) target = $region32
    $region31: #{diag_gaussian_action_head_forward.1} parent=5 // pred_region
      %s141 = ssub.s32 %s9, 1
      %p142 = scmp.lt.s32.totalorder %s14, 1
      %s143 = scalar_select %p142, %s14, 1
      %s144 = smul.addr %s143, 8
      %s145 = scalar_lea.vmem %s0, %s144
      %p146 = pneg %p35
      %p147 = pneg %p32
      %p148 = pneg %p56
      %p149 = pneg %p53
      %p150 = pneg %p77
      %p151 = pneg %p74
      %p152 = pneg %p103
      %p153 = pneg %p100
      %p154 = scmp.lt.s32.totalorder %s14, 1
      %s155 = scalar_select %p154, %s14, 1
      %s156 = smul.addr %s155, 8
      %s157 = scalar_lea.vmem %s3, %s156
      %p158 = scmp.lt.s32.totalorder %s14, 1
      %s159 = scalar_select %p158, %s14, 1
      %s160 = smul.addr %s159, 8
      %s161 = scalar_lea.vmem %s0, %s160
      %p162 = scmp.lt.s32.totalorder %s14, 1
      %s163 = scalar_select %p162, %s14, 1
      %s164 = smul.addr %s163, 8
      %s165 = scalar_lea.vmem %s3, %s164
      %v166 = vld [vmem:[%s161] sm:$0xff]
      %v167 = vld [vmem:[%s1] sm:$0xff]
      %v168 = vld [vmem:[%s1 + $0x8] sm:$0xff]
      %v169 = vld [vmem:[%s1 + $0x10] sm:$0xff]
      %v170 = vld [vmem:[%s1 + $0x18] sm:$0xff]
      %v171 = vld [vmem:[%s2] sm:$0x1]
      %v173 = vlaneseq
      %v174 = vshrl.u32 %v173, 7
      %v175 = vsub.s32 0, %v174
      %v176 = vrot.slane %v171, %v175
      %vm178 = vcmask 261120
      %v180 = vsel %vm178, %v166, 0
      %182 = vmatprep.subr.mxu0 0.0
      %183 = vmatpush1.msra.mxu0 0.0
      %184 = vmatprep.subr.mxu0 0.0
      %185 = vmatpush1.msra.mxu0 0.0
      %186 = vmatprep.subr.mxu0 0.0
      %187 = vmatpush1.msra.mxu0 0.0
      %188 = vmatprep.subr.mxu0 0.0
      %189 = vmatpush1.msra.mxu0 0.0
      %190 = vmatprep.subr.mxu0 0.0
      %191 = vmatpush1.msra.mxu0 0.0
      %192 = vmatprep.subr.mxu0 0.0
      %193 = vmatpush1.msra.mxu0 0.0
      %194 = vmatprep.subr.mxu0 0.0
      %195 = vmatpush1.msra.mxu0 0.0
      %196 = vmatprep.subr.mxu0 0.0
      %197 = vmatpush1.msra.mxu0 0.0
      %198 = vmatprep.subr.mxu0 0.0
      %199 = vmatpush1.msra.mxu0 0.0
      %200 = vmatprep.subr.mxu0 0.0
      %201 = vmatpush1.msra.mxu0 0.0
      %202 = vmatprep.subr.mxu0 0.0
      %203 = vmatpush1.msra.mxu0 0.0
      %204 = vmatprep.subr.mxu0 0.0
      %205 = vmatpush1.msra.mxu0 0.0
      %206 = vmatprep.subr.mxu0 0.0
      %207 = vmatpush1.msra.mxu0 %v170
      %208 = vmatprep.subr.mxu0 0.0
      %209 = vmatpush1.msra.mxu0 %v169
      %210 = vmatprep.subr.mxu0 0.0
      %211 = vmatpush1.msra.mxu0 %v168
      %212 = vmatprep.subr.mxu0 0.0
      %213 = vmatpush1.msra.mxu0 %v167
      %214 = vmatprep.subr.mxu0 0.0
      %215 = vmatpush2.msra.mxu0 0.0
      %216 = vmatprep.subr.mxu0 0.0
      %217 = vmatpush2.msra.mxu0 0.0
      %218 = vmatprep.subr.mxu0 0.0
      %219 = vmatpush2.msra.mxu0 0.0
      %220 = vmatprep.subr.mxu0 0.0
      %221 = vmatpush2.msra.mxu0 0.0
      %222 = vmatprep.subr.mxu0 0.0
      %223 = vmatpush2.msra.mxu0 0.0
      %224 = vmatprep.subr.mxu0 0.0
      %225 = vmatpush2.msra.mxu0 0.0
      %226 = vmatprep.subr.mxu0 0.0
      %227 = vmatpush2.msra.mxu0 0.0
      %228 = vmatprep.subr.mxu0 0.0
      %229 = vmatpush2.msra.mxu0 0.0
      %230 = vmatprep.subr.mxu0 0.0
      %231 = vmatpush2.msra.mxu0 0.0
      %232 = vmatprep.subr.mxu0 0.0
      %233 = vmatpush2.msra.mxu0 0.0
      %234 = vmatprep.subr.mxu0 0.0
      %235 = vmatpush2.msra.mxu0 0.0
      %236 = vmatprep.subr.mxu0 0.0
      %237 = vmatpush2.msra.mxu0 0.0
      %238 = vmatprep.subr.mxu0 0.0
      %239 = vmatpush2.msra.mxu0 0.0
      %240 = vmatprep.subr.mxu0 0.0
      %241 = vmatpush2.msra.mxu0 0.0
      %242 = vmatprep.subr.mxu0 0.0
      %243 = vmatpush2.msra.mxu0 0.0
      %244 = vmatprep.subr.mxu0 0.0
      %245 = vmatpush2.msra.mxu0 0.0
      %246 = vmatprep.mubr.f32.mxu0 0.0
      %247 = vmatmul.mubr.f32.gmra.mxu0 %v180
      %v248 = vpop.f32.mrf.mxu0
      %v249 = vadd.f32 %v176, %v248
      %v250 = vpop.f32.mrf.mxu0
      %251 = vdwg.mxu0
      %vm252 = vcmask 130048
      %253 = vst.msk [vmem:[%s165] sm:$0xff] %vm252, %v249
      %p254 = scmp.lt.s32.totalorder %s14, 1
      %s255 = scalar_select %p254, %s14, 1
      %s256 = smul.addr %s255, 8
      %s257 = scalar_lea.vmem %s3, %s256
      // Predicated region
      $region33: #{diag_gaussian_action_head_forward.1} parent=31 // pred_check
        %p258 = pneg %p100
      $region34: #{diag_gaussian_action_head_forward.1} parent=31 // pred_check_branch
        %260 = sbr.rel (%p258) target = $region36
      $region35: #{diag_gaussian_action_head_forward.1} parent=31 // pred_region
        _
      $region36: #{diag_gaussian_action_head_forward.1} parent=31 // pred_fallthru
        _
    $region32: #{diag_gaussian_action_head_forward.1} parent=5 // pred_fallthru
      _
    %p261 = scmp.le.s32.totalorder 2, %s9
    // Predicated region
    $region37: #{diag_gaussian_action_head_forward.1} parent=5 // pred_check
      %p262 = pneg %p261
    $region38: #{diag_gaussian_action_head_forward.1} parent=5 // pred_check_branch
      %264 = sbr.rel (%p262) target = $region40
    $region39: #{diag_gaussian_action_head_forward.1} parent=5 // pred_region
      %s265 = ssub.s32 %s9, 2
      // Predicated region
      $region41: #{diag_gaussian_action_head_forward.1} parent=39 // pred_check
        %p266 = pneg %p106
      $region42: #{diag_gaussian_action_head_forward.1} parent=39 // pred_check_branch
        %268 = sbr.rel (%p266) target = $region44
      $region43: #{diag_gaussian_action_head_forward.1} parent=39 // pred_region
        %p269 = scmp.lt.s32.totalorder %s15, 1
        %s270 = scalar_select %p269, %s15, 1
        %s271 = smul.addr %s270, 8
        %s272 = scalar_lea.vmem %s3, %s271
      $region44: #{diag_gaussian_action_head_forward.1} parent=39 // pred_fallthru
        _
    $region40: #{diag_gaussian_action_head_forward.1} parent=5 // pred_fallthru
      _
  $region6: #{diag_gaussian_action_head_forward.1} parent=0 // loop_footer
    %s13 = sadd.s32 1, %s9
  $region7: #{diag_gaussian_action_head_forward.1} parent=0 // loop_footer_branch
    %8 = sbr.rel target = $region3
  $region8: #{diag_gaussian_action_head_forward.1} parent=0 // loop_exit
    _

</llo_original>
